<compile_context>
chip_gen: v6e
topology: v6e:2x2x1
jax: 0.10.0
libtpu: 0.0.40
codegen_flags: <defaults>
</compile_context>

<pallas_src>
import jax
import jax.numpy as jnp
from jax import lax
from jax.experimental import pallas as pl
from jax.experimental.pallas import tpu as pltpu

_LANE = 128
_SUBLANE = 8

_VMEM_LIMIT_BYTES = 48 * 1024 * 1024   # explicit scoped-VMEM limit (all gens)
_VMEM_TILE_BUDGET = 36 * 1024 * 1024   # resident double-buffered tiles


def _cdiv(a, b):
    return -(-a // b)


def mlp3_kernel(x_ref, w_ref, b_ref, o_ref):
    x = x_ref[...]                       # (TB, n_mlp), native dtype (no f32 cast)
    w = w_ref[...]                       # (2,  n_mlp), native dtype

    # z[c, t] = sum_k w[c, k] * x[t, k]  ->  (2, TB): classes on sublanes,
    # batch on lanes (lane-dense epilogue and stores).  f32 MXU accumulation.
    z = lax.dot_general(
        w, x,
        dimension_numbers=(((1,), (1,)), ((), ())),
        preferred_element_type=jnp.float32,
    )

    # Bias + LeakyReLU on the whole (2, TB) block.
    # leaky_relu(v) = max(v, 0.01*v) since the negative slope is < 1.
    zb = z + b_ref[...].astype(jnp.float32)          # (2, 1) broadcast over lanes
    a = jnp.maximum(zb, 0.01 * zb)

    # 2-class softmax as paired sigmoids of the logit difference (no cross-lane
    # reductions, no divide).  Row 1 uses sigmoid(a1 - a0) directly so small
    # probabilities keep relative accuracy.  On ragged final tiles the padded
    # lanes hold unspecified values; those lanes are discarded on writeback.
    d = a[0:1, :] - a[1:2, :]                        # (1, TB)
    o_ref[0:1, :] = jax.nn.sigmoid(d).astype(o_ref.dtype)
    o_ref[1:2, :] = jax.nn.sigmoid(-d).astype(o_ref.dtype)


def _pick_batch_tile(batch, n_mlp, itemsize, budget_bytes):
    """Largest 128-aligned batch tile whose double-buffered *padded* VMEM
    footprint fits the budget, clamped so large batches keep >= 2 grid steps
    (v7x megacore)."""
    padded_k = _cdiv(n_mlp, _LANE) * _LANE
    x_row = padded_k * itemsize                    # lane-padded x bytes per row
    out_row = _SUBLANE * itemsize                  # (2, TB) tile pads to 8 sublanes
    w_bytes = 2 * _SUBLANE * padded_k * itemsize   # resident weight (both buffers)
    per_row = 2 * (x_row + out_row)                # double-buffered in + out tiles
    rows = max(_LANE, (budget_bytes - w_bytes) // per_row)
    cap = (rows // _LANE) * _LANE
    if batch <= min(1024, cap):
        return batch                               # single full-array block
    half = _cdiv(_cdiv(batch, 2), _LANE) * _LANE   # keep grid >= 2
    return max(_LANE, min(cap, half))


def mlp_3_forward(x, weight, bias, *, class_major=False):
    """x: (B, n_mlp), weight: (2, n_mlp), bias: (2,).

    Returns softmax(leaky_relu(x @ weight.T + bias)): (B, 2) by default, or the
    lane-dense (2, B) kernel output when class_major=True (no layout pass).
    """
    B, n_mlp = x.shape
    assert weight.shape == (2, n_mlp) and bias.shape == (2,)

    TB = _pick_batch_tile(B, n_mlp, jnp.dtype(x.dtype).itemsize,
                          _VMEM_TILE_BUDGET)
    grid = (pl.cdiv(B, TB),)

    bias2 = bias.reshape(2, 1)                     # tiny resident VMEM operand

    out_t = pl.pallas_call(
        mlp3_kernel,
        out_shape=jax.ShapeDtypeStruct((2, B), x.dtype),
        grid_spec=pl.GridSpec(
            grid=grid,
            in_specs=[
                pl.BlockSpec((TB, n_mlp), lambda i: (i, 0)),    # x tile
                pl.BlockSpec((2, n_mlp), lambda i: (0, 0)),     # resident weight
                pl.BlockSpec((2, 1), lambda i: (0, 0)),         # resident bias
            ],
            out_specs=pl.BlockSpec((2, TB), lambda i: (0, i)),  # lane-dense
        ),
        compiler_params=pltpu.CompilerParams(
            dimension_semantics=("parallel",),     # megacore-split the batch axis
            vmem_limit_bytes=_VMEM_LIMIT_BYTES,
        ),
    )(x, weight, bias2)

    if class_major:
        return out_t            # (2, B): no extra HBM pass
    # Module contract is (B, 2); this is the only remaining layout pass and it
    # touches just 2*B elements.  Consumers that can accept class-major data
    # should use class_major=True instead.
    return out_t.T


def _reference(x, weight, bias):
    z = x @ weight.T + bias
    z = jnp.where(z >= 0, z, 0.01 * z)
    return jax.nn.softmax(z, axis=1)


if __name__ == "__main__":
    key = jax.random.PRNGKey(0)
    k_x, k_w, k_b, k_x2 = jax.random.split(key, 4)

    n_mlp = 32
    bound = 1.0 / jnp.sqrt(jnp.float32(n_mlp))
    weight = jax.random.uniform(k_w, (2, n_mlp), jnp.float32, -bound, bound)
    bias = jax.random.uniform(k_b, (2,), jnp.float32, -bound, bound)

    # Small shape consistent with the module (single-block path).
    B = 8
    x = jax.random.normal(k_x, (B, n_mlp), jnp.float32)
    out = jax.block_until_ready(mlp_3_forward(x, weight, bias))
    y_ref = _reference(x, weight, bias)
    assert out.shape == (B, 2)
    assert jnp.allclose(out, y_ref, atol=1e-5), "mismatch vs reference (B=8)"

    # Larger batch: exercises the tiled grid (2 parallel steps).
    B2 = 4096
    x2 = jax.random.normal(k_x2, (B2, n_mlp), jnp.float32)
    out2 = jax.block_until_ready(mlp_3_forward(x2, weight, bias))
    y_ref2 = _reference(x2, weight, bias)
    assert out2.shape == (B2, 2)
    assert jnp.allclose(out2, y_ref2, atol=1e-5), "mismatch vs reference (B=4096)"

    print("KERNEL_OK")
</pallas_src>

<mosaic_0001>
module attributes {stable_mosaic.version = 11 : i64} {
  func.func @mlp3_kernel(%arg0: i32, %arg1: memref<8x32xf32, #tpu.memory_space<vmem>>, %arg2: memref<2x32xf32, #tpu.memory_space<vmem>>, %arg3: memref<2x1xf32, #tpu.memory_space<vmem>>, %arg4: memref<2x8xf32, #tpu.memory_space<vmem>>) attributes {dimension_semantics = [#tpu.dimension_semantics<parallel>], iteration_bounds = array<i64: 1>, scalar_prefetch = 0 : i64, scratch_operands = 0 : i64, tpu.core_type = #tpu.core_type<tc>, window_params = [{transform_indices = @transform_0, window_bounds = array<i64: 8, 32>}, {pipeline_mode = #tpu.pipeline_mode<synchronous>, transform_indices = @transform_1, window_bounds = array<i64: 2, 32>}, {pipeline_mode = #tpu.pipeline_mode<synchronous>, transform_indices = @transform_2, window_bounds = array<i64: 2, 1>}, {transform_indices = @transform_3, window_bounds = array<i64: 2, 8>}]} {
    %c0 = arith.constant 0 : index
    %c0_0 = arith.constant 0 : index
    %0 = vector.load %arg1[%c0, %c0_0] : memref<8x32xf32, #tpu.memory_space<vmem>>, vector<8x32xf32>
    %c0_1 = arith.constant 0 : index
    %c0_2 = arith.constant 0 : index
    %1 = vector.load %arg2[%c0_1, %c0_2] : memref<2x32xf32, #tpu.memory_space<vmem>>, vector<2x32xf32>
    %cst = arith.constant dense<0.000000e+00> : vector<2x8xf32>
    %2 = tpu.matmul %1, %0, %cst {dimension_numbers = #tpu.dot_dimension_numbers<[1], [1], [0], [0], [0, 0, 1, 0], [], []>} : vector<2x32xf32>, vector<8x32xf32>, vector<2x8xf32> -> vector<2x8xf32>
    %c0_3 = arith.constant 0 : index
    %c0_4 = arith.constant 0 : index
    %3 = vector.load %arg3[%c0_3, %c0_4] : memref<2x1xf32, #tpu.memory_space<vmem>>, vector<2x1xf32>
    %4 = vector.broadcast %3 : vector<2x1xf32> to vector<2x8xf32>
    %5 = arith.addf %2, %4 : vector<2x8xf32>
    %cst_5 = arith.constant 0.00999999977 : f32
    %6 = vector.broadcast %cst_5 : f32 to vector<2x8xf32>
    %7 = arith.mulf %6, %5 : vector<2x8xf32>
    %8 = arith.maximumf %5, %7 : vector<2x8xf32>
    %9 = vector.extract_strided_slice %8 {offsets = [0, 0], sizes = [1, 8], strides = [1, 1]} : vector<2x8xf32> to vector<1x8xf32>
    %10 = vector.extract_strided_slice %8 {offsets = [1, 0], sizes = [1, 8], strides = [1, 1]} : vector<2x8xf32> to vector<1x8xf32>
    %11 = arith.subf %9, %10 : vector<1x8xf32>
    %12 = arith.negf %11 : vector<1x8xf32>
    %13 = math.exp %12 : vector<1x8xf32>
    %cst_6 = arith.constant 1.000000e+00 : f32
    %14 = vector.broadcast %cst_6 : f32 to vector<1x8xf32>
    %15 = arith.addf %14, %13 : vector<1x8xf32>
    %16 = arith.divf %14, %15 : vector<1x8xf32>
    %c0_7 = arith.constant 0 : index
    %c0_8 = arith.constant 0 : index
    %17 = vector.load %arg4[%c0_7, %c0_8] : memref<2x8xf32, #tpu.memory_space<vmem>>, vector<1x8xf32>
    tpu.vector_store %arg4[%c0_7, %c0_8], %16 {strides = array<i32>} : memref<2x8xf32, #tpu.memory_space<vmem>>, vector<1x8xf32>,
    %cst_9 = arith.constant 0.000000e+00 : f32
    %18 = vector.broadcast %cst_9 : f32 to vector<1x8xf32>
    %19 = arith.subf %18, %11 : vector<1x8xf32>
    %20 = arith.negf %19 : vector<1x8xf32>
    %21 = math.exp %20 : vector<1x8xf32>
    %cst_10 = arith.constant 1.000000e+00 : f32
    %22 = vector.broadcast %cst_10 : f32 to vector<1x8xf32>
    %23 = arith.addf %22, %21 : vector<1x8xf32>
    %24 = arith.divf %22, %23 : vector<1x8xf32>
    %c1 = arith.constant 1 : index
    %c0_11 = arith.constant 0 : index
    %25 = vector.load %arg4[%c1, %c0_11] : memref<2x8xf32, #tpu.memory_space<vmem>>, vector<1x8xf32>
    tpu.vector_store %arg4[%c1, %c0_11], %24 {strides = array<i32>} : memref<2x8xf32, #tpu.memory_space<vmem>>, vector<1x8xf32>,
    return
  }
  func.func @transform_0(%arg0: i32) -> (i32, i32) {
    %c0_i32 = arith.constant 0 : i32
    %c0_i32_0 = arith.constant 0 : i32
    return %arg0, %c0_i32 : i32, i32
  }
  func.func @transform_1(%arg0: i32) -> (i32, i32) {
    %c0_i32 = arith.constant 0 : i32
    %c0_i32_0 = arith.constant 0 : i32
    %c0_i32_1 = arith.constant 0 : i32
    return %c0_i32, %c0_i32_0 : i32, i32
  }
  func.func @transform_2(%arg0: i32) -> (i32, i32) {
    %c0_i32 = arith.constant 0 : i32
    %c0_i32_0 = arith.constant 0 : i32
    %c0_i32_1 = arith.constant 0 : i32
    return %c0_i32, %c0_i32_0 : i32, i32
  }
  func.func @transform_3(%arg0: i32) -> (i32, i32) {
    %c0_i32 = arith.constant 0 : i32
    %c0_i32_0 = arith.constant 0 : i32
    return %c0_i32, %arg0 : i32, i32
  }
}

</mosaic_0001>

<llo_original>
// kernel: tpu_custom_call.1
$region0: #{tpu_custom_call.1}
  #allocation0 [shape = 'u32[]', space=smem, size = 0x4, offset = 0x4, fixed_abs, tag = 'smem constant byte address 0x4 - core index']
  #allocation1 [shape = 'u32[144,128]{1,0:T(1,128)}', space=vmem, size = 0x12000, scoped, tag = 'internal scratch']
  %s0 = inlined_call_operand.hbm [shape: f32[8,32], index: 0, kind: input, shape index: {}]
  %s1 = inlined_call_operand.vmem [shape: f32[2,32], index: 1, kind: input, shape index: {}]
  %s2 = inlined_call_operand.vmem [shape: f32[2,1], index: 2, kind: input, shape index: {}]
  %s3 = inlined_call_operand.hbm [shape: f32[2,8], index: 3, kind: output, shape index: {}]
  %s4 = sld [smem:[#allocation0]]
  $region26: #{tpu_custom_call.1} parent=0
    _
  %s6 = ssub.s32 1, %s4
  %s7 = scalar_select 0, %s6, %s4
  $region1: #{tpu_custom_call.1} parent=0
    #allocation2 [shape = 'u8[4096]{0}', space=vmem, size = 0x1000, scoped, tag = 'input window, operand 0, single buffered']
    #allocation3 [shape = 's32[1]{0}', space=sflag, size = 0x4, scoped, tag = 'scoped memory for tpu_custom_call.1']
    #allocation4 [shape = 's32[1]{0}', space=sflag, size = 0x4, scoped, tag = 'scoped memory for tpu_custom_call.1']
    #allocation5 [shape = 'u8[1024]{0}', space=vmem, size = 0x400, scoped, tag = 'output window, operand 0, single buffered']
    %8 = vsyncpa [#allocation3], 0
    %9 = vsyncpa [#allocation4], 0
    // Predicated region
    $region2: #{tpu_custom_call.1} parent=1 // pred_check
      _
    $region3: #{tpu_custom_call.1} parent=1 // pred_check_branch
      %11 = sbr.rel (0) target = $region5
    $region4: #{tpu_custom_call.1} parent=1 // pred_region
      %s13 = ssub.s32 128, 128
      %14 = vsyncadd [#allocation3], %s13
      %s16 = sshll.u32 [#allocation2], 4
      %s17 = int_to_ptr.vmem [resolvable:$true] %s16
      %19 = dma.hbm_to_vmem [thread:$0]  %s0, 128, %s17, [#allocation3]
    $region5: #{tpu_custom_call.1} parent=1 // pred_fallthru
      _
    // Predicated region
    $region6: #{tpu_custom_call.1} parent=1 // pred_check
      _
    $region7: #{tpu_custom_call.1} parent=1 // pred_check_branch
      %21 = sbr.rel (0) target = $region9
    $region8: #{tpu_custom_call.1} parent=1 // pred_region
      _
    $region9: #{tpu_custom_call.1} parent=1 // pred_fallthru
      _
    // Predicated region
    $region10: #{tpu_custom_call.1} parent=1 // pred_check
      _
    $region11: #{tpu_custom_call.1} parent=1 // pred_check_branch
      %23 = sbr.rel (0) target = $region13
    $region12: #{tpu_custom_call.1} parent=1 // pred_region
      _
    $region13: #{tpu_custom_call.1} parent=1 // pred_fallthru
      _
    // Predicated region
    $region14: #{tpu_custom_call.1} parent=1 // pred_check
      _
    $region15: #{tpu_custom_call.1} parent=1 // pred_check_branch
      %25 = sbr.rel (0) target = $region17
    $region16: #{tpu_custom_call.1} parent=1 // pred_region
      %26 = dma.done [#allocation3], 128
    $region17: #{tpu_custom_call.1} parent=1 // pred_fallthru
      _
    %v27 = vld [vmem:[#allocation2] sm:$0xff]
    %v28 = vld [vmem:[%s1] sm:$0x3]
    %v29 = vld [vmem:[%s2] sm:$0x3]
    %31 = vset.pattern.permute.xlu0 0
    %32 = vperm.xlu0 %31, %v29
    %v33 = vpop.permute.xlu0 %32
    %vm35 = vcmask 261120
    %v37 = vsel %vm35, %v28, 0
    %v40 = vsel %vm35, %v27, 0
    %42 = vmatprep.subr.mxu0 0.0
    %43 = vmatpush1.xpose.msra.mxu0 0.0
    %44 = vmatprep.subr.mxu0 0.0
    %45 = vmatpush1.xpose.msra.mxu0 0.0
    %46 = vmatprep.subr.mxu0 0.0
    %47 = vmatpush1.xpose.msra.mxu0 0.0
    %48 = vmatprep.subr.mxu0 0.0
    %49 = vmatpush1.xpose.msra.mxu0 0.0
    %50 = vmatprep.subr.mxu0 0.0
    %51 = vmatpush1.xpose.msra.mxu0 0.0
    %52 = vmatprep.subr.mxu0 0.0
    %53 = vmatpush1.xpose.msra.mxu0 0.0
    %54 = vmatprep.subr.mxu0 0.0
    %55 = vmatpush1.xpose.msra.mxu0 0.0
    %56 = vmatprep.subr.mxu0 0.0
    %57 = vmatpush1.xpose.msra.mxu0 0.0
    %58 = vmatprep.subr.mxu0 0.0
    %59 = vmatpush1.xpose.msra.mxu0 0.0
    %60 = vmatprep.subr.mxu0 0.0
    %61 = vmatpush1.xpose.msra.mxu0 0.0
    %62 = vmatprep.subr.mxu0 0.0
    %63 = vmatpush1.xpose.msra.mxu0 0.0
    %64 = vmatprep.subr.mxu0 0.0
    %65 = vmatpush1.xpose.msra.mxu0 0.0
    %66 = vmatprep.subr.mxu0 0.0
    %67 = vmatpush1.xpose.msra.mxu0 0.0
    %68 = vmatprep.subr.mxu0 0.0
    %69 = vmatpush1.xpose.msra.mxu0 0.0
    %70 = vmatprep.subr.mxu0 0.0
    %71 = vmatpush1.xpose.msra.mxu0 0.0
    %72 = vmatprep.subr.mxu0 0.0
    %73 = vmatpush1.xpose.msra.mxu0 %v40
    %74 = vmatprep.subr.mxu0 0.0
    %75 = vmatpush2.xpose.msra.mxu0 0.0
    %76 = vmatprep.subr.mxu0 0.0
    %77 = vmatpush2.xpose.msra.mxu0 0.0
    %78 = vmatprep.subr.mxu0 0.0
    %79 = vmatpush2.xpose.msra.mxu0 0.0
    %80 = vmatprep.subr.mxu0 0.0
    %81 = vmatpush2.xpose.msra.mxu0 0.0
    %82 = vmatprep.subr.mxu0 0.0
    %83 = vmatpush2.xpose.msra.mxu0 0.0
    %84 = vmatprep.subr.mxu0 0.0
    %85 = vmatpush2.xpose.msra.mxu0 0.0
    %86 = vmatprep.subr.mxu0 0.0
    %87 = vmatpush2.xpose.msra.mxu0 0.0
    %88 = vmatprep.subr.mxu0 0.0
    %89 = vmatpush2.xpose.msra.mxu0 0.0
    %90 = vmatprep.subr.mxu0 0.0
    %91 = vmatpush2.xpose.msra.mxu0 0.0
    %92 = vmatprep.subr.mxu0 0.0
    %93 = vmatpush2.xpose.msra.mxu0 0.0
    %94 = vmatprep.subr.mxu0 0.0
    %95 = vmatpush2.xpose.msra.mxu0 0.0
    %96 = vmatprep.subr.mxu0 0.0
    %97 = vmatpush2.xpose.msra.mxu0 0.0
    %98 = vmatprep.subr.mxu0 0.0
    %99 = vmatpush2.xpose.msra.mxu0 0.0
    %100 = vmatprep.subr.mxu0 0.0
    %101 = vmatpush2.xpose.msra.mxu0 0.0
    %102 = vmatprep.subr.mxu0 0.0
    %103 = vmatpush2.xpose.msra.mxu0 0.0
    %104 = vmatprep.subr.mxu0 0.0
    %105 = vmatpush2.xpose.msra.mxu0 0.0
    %106 = vmatprep.mubr.f32.mxu0 0.0
    %107 = vmatmul.mubr.f32.gmra.mxu0 %v37
    %v108 = vpop.f32.mrf.mxu0
    %v109 = vadd.f32 %v33, %v108
    %v110 = vpop.f32.mrf.mxu0
    %111 = vdwg.mxu0
    %v112 = vmul.f32 %v109, 0.01
    %v113 = vmax.f32 %v109, %v112
    %v115 = vrot.slane %v113, 1
    %v117 = vsub.f32 %v113, %v115
    %v118 = vxor.u32 %v117, 2147483648
    %v119 = vmul.f32 %v118, 1.442695
    %v120 = vpow.pop %v119
    %v121 = vadd.f32 %v120, 1.0
    %v122 = vrcp.pop %v121
    %v123 = vmul.f32 1.0, %v122
    %vm124 = vcmask 57344
    %125 = vst.msk [vmem:[#allocation5] sm:$0x1] %vm124, %v123
    %v126 = vsub.f32 0.0, %v117
    %v127 = vxor.u32 %v126, 2147483648
    %v128 = vmul.f32 %v127, 1.442695
    %v129 = vpow.pop %v128
    %v130 = vadd.f32 %v129, 1.0
    %v131 = vrcp.pop %v130
    %v132 = vmul.f32 1.0, %v131
    %133 = vst.msk [vmem:[#allocation5 + $0x1] sm:$0x1] %vm124, %v132
    // Predicated region
    $region18: #{tpu_custom_call.1} parent=1 // pred_check
      _
    $region19: #{tpu_custom_call.1} parent=1 // pred_check_branch
      %135 = sbr.rel (0) target = $region21
    $region20: #{tpu_custom_call.1} parent=1 // pred_region
      %s137 = ssub.s32 32, 32
      %138 = vsyncadd [#allocation4], %s137
      %s140 = sshll.u32 [#allocation5], 4
      %s141 = int_to_ptr.vmem [resolvable:$true] %s140
      %143 = dma.vmem_to_hbm [thread:$0]  %s141, 32, %s3, [#allocation4]
    $region21: #{tpu_custom_call.1} parent=1 // pred_fallthru
      _
    // Predicated region
    $region22: #{tpu_custom_call.1} parent=1 // pred_check
      _
    $region23: #{tpu_custom_call.1} parent=1 // pred_check_branch
      %145 = sbr.rel (0) target = $region25
    $region24: #{tpu_custom_call.1} parent=1 // pred_region
      %146 = dma.done [#allocation4], 32
    $region25: #{tpu_custom_call.1} parent=1 // pred_fallthru
      _
    %147 = vsyncpa [#allocation3], 1
    %148 = vsyncpa [#allocation4], 1

</llo_original>
